<compile_context>
chip_gen: v7x
topology: tpu7x:2x2x1
jax: 0.10.0
libtpu: 0.0.40
codegen_flags: <defaults>
</compile_context>

<pallas_src>
import jax
import jax.numpy as jnp
from jax.experimental import pallas as pl
from jax.experimental.pallas import tpu as pltpu


def _ffn_kernel(x_ref, w1_ref, b1_ref, w2_ref, b2_ref, o_ref):
    # x_ref : (TM, LANES)   token(-group) rows, hidden(-groups) on lanes
    # w*_ref: (LANES, LANES) W^T (block-diagonal expansion when tokens packed)
    # b*_ref: (1, LANES)    float32
    x = x_ref[...]                                    # original dtype (residual)
    xm = x if x.dtype == w1_ref.dtype else x.astype(w1_ref.dtype)
    h = jnp.dot(xm, w1_ref[...], preferred_element_type=jnp.float32)
    h = jnp.maximum(h + b1_ref[...], 0.0)             # f32 elementwise tail
    y = jnp.dot(h.astype(w2_ref.dtype), w2_ref[...],
                preferred_element_type=jnp.float32)
    o_ref[...] = (y + b2_ref[...] + x.astype(jnp.float32)).astype(o_ref.dtype)


def _round_down(x, m):
    return (x // m) * m


def _round_up(x, m):
    return ((x + m - 1) // m) * m


def _cdiv(a, b):
    return -(-a // b)


def _vmem_budgets():
    """Returns (tile budget bytes, scoped vmem_limit_bytes), generation aware."""
    cap = None
    try:
        cap = getattr(pltpu.get_tpu_info(), "vmem_capacity_bytes", None)
    except Exception:
        cap = None
    if cap is None:
        cap = 64 * 1024 * 1024                         # assume smallest (v7x per-TC)
    if cap >= 96 * 1024 * 1024:                        # v5e / v6e: 128 MiB VMEM
        return 56 * 1024 * 1024, 100 * 1024 * 1024
    return 20 * 1024 * 1024, 32 * 1024 * 1024          # v7x-safe


def _choose_tile_rows(n_rows, lanes, in_bytes, out_bytes, w_bytes, budget_bytes,
                      min_tiles=2):
    # Sublane multiple of the narrowest pipelined dtype (8 f32 / 16 bf16 / 32 i8).
    sub = max(8, 32 // max(1, min(in_bytes, out_bytes)))
    # Weights/biases have constant index maps but still get double-buffered VMEM.
    resident = 2 * (2 * lanes * lanes * w_bytes + 2 * lanes * 4)
    avail = max(budget_bytes - resident, 2 * 1024 * 1024)
    # Double-buffered x and out tiles + ~3 f32 temporaries per row.
    per_row = lanes * (2 * in_bytes + 2 * out_bytes + 3 * 4)
    tm = max(sub, min(4096, _round_down(int(avail // per_row), sub)))
    if tm >= n_rows:
        tm = n_rows                       # full-extent row block is always legal
    # v7x: two TensorCores split the "parallel" grid axis -- give both work.
    if min_tiles > 1 and n_rows >= min_tiles * sub:
        while _cdiv(n_rows, tm) < min_tiles and tm > sub:
            tm = max(sub, _round_down(tm // 2, sub))
    # Prefer an even tile count so the tail doesn't land entirely on one core.
    n_tiles = _cdiv(n_rows, tm)
    if n_tiles > 1 and n_tiles % 2 == 1:
        cand = _round_up(_cdiv(n_rows, n_tiles + 1), sub)
        if cand >= sub and _cdiv(n_rows, cand) % 2 == 0:
            tm = cand
    return tm


def _ffn_pallas(x2d, w1p, b1p, w2p, b2p):
    rows, lanes = x2d.shape
    in_b = x2d.dtype.itemsize
    w_b = w1p.dtype.itemsize
    budget_bytes, vmem_limit = _vmem_budgets()
    tm = _choose_tile_rows(rows, lanes, in_b, in_b, w_b, budget_bytes)
    grid = (pl.cdiv(rows, tm),)

    cost = pl.CostEstimate(
        flops=4 * rows * lanes * lanes,
        transcendentals=0,
        bytes_accessed=2 * rows * lanes * in_b + 2 * lanes * lanes * w_b,
    )

    return pl.pallas_call(
        _ffn_kernel,
        out_shape=jax.ShapeDtypeStruct((rows, lanes), x2d.dtype),
        grid_spec=pltpu.PrefetchScalarGridSpec(
            num_scalar_prefetch=0,
            grid=grid,
            in_specs=[
                pl.BlockSpec((tm, lanes), lambda i: (i, 0)),     # x (pipelined)
                pl.BlockSpec((lanes, lanes), lambda i: (0, 0)),  # W1^T (resident)
                pl.BlockSpec((1, lanes), lambda i: (0, 0)),      # b1 (resident)
                pl.BlockSpec((lanes, lanes), lambda i: (0, 0)),  # W2^T (resident)
                pl.BlockSpec((1, lanes), lambda i: (0, 0)),      # b2 (resident)
            ],
            out_specs=pl.BlockSpec((tm, lanes), lambda i: (i, 0)),
        ),
        compiler_params=pltpu.CompilerParams(
            dimension_semantics=("parallel",),          # megacore-shardable tiles
            vmem_limit_bytes=vmem_limit,
        ),
        cost_estimate=cost,
    )(x2d, w1p, b1p, w2p, b2p)


def prepare_ffn_params(w1, b1, w2, b2, hp, group, compute_dtype):
    """Transpose, zero-pad hidden to Hp, cast to the activation dtype, and
    block-diagonal expand when tokens are lane-packed.

    Depends only on weights / static shapes, so callers can hoist/cache it.
    """
    if w1.ndim == 3:            # PyTorch Conv1d layout (out_ch, in_ch, 1)
        w1 = w1[..., 0]
    if w2.ndim == 3:
        w2 = w2[..., 0]
    h = w1.shape[0]
    # x @ W^T == Conv1d(kernel_size=1).  Cast once so bf16 activations never
    # hit f32 weights (mixed dot would take the slow multi-pass MXU path).
    w1_t = w1.T.astype(compute_dtype)
    w2_t = w2.T.astype(compute_dtype)
    b1 = b1.astype(jnp.float32)
    b2 = b2.astype(jnp.float32)
    if hp != h:
        w1_t = jnp.pad(w1_t, ((0, hp - h), (0, hp - h)))
        w2_t = jnp.pad(w2_t, ((0, hp - h), (0, hp - h)))
        b1 = jnp.pad(b1, (0, hp - h))
        b2 = jnp.pad(b2, (0, hp - h))
    if group > 1:
        eye = jnp.eye(group, dtype=compute_dtype)
        w1_t = jnp.kron(eye, w1_t)          # (G*Hp, G*Hp) block-diagonal
        w2_t = jnp.kron(eye, w2_t)
        b1 = jnp.tile(b1, group)
        b2 = jnp.tile(b2, group)
    return w1_t, b1.reshape(1, -1), w2_t, b2.reshape(1, -1)


@jax.jit
def pointwise_feedforward(inputs, w1, b1, w2, b2):
    """inputs: (B, L, H); w1, w2: (H, H) PyTorch Conv1d (out_ch, in_ch[, 1]); b: (H,)."""
    B, L, H = inputs.shape
    N = B * L

    # Lane-dense packing: pad hidden to Hp (power of two dividing 128 when
    # H <= 128, else a multiple of 128) and fold G = 128 // Hp consecutive
    # tokens into the lane axis so every load/store is a full 128-lane vld/vst.
    if H <= 128:
        hp = min(128, pl.next_power_of_2(max(H, 1)))
        group = 128 // hp
    else:
        hp = _round_up(H, 128)
        group = 1

    x2d = inputs.reshape(N, H)
    if hp != H:
        x2d = jnp.pad(x2d, ((0, 0), (0, hp - H)))
    n_pad = (-N) % group
    if n_pad:
        x2d = jnp.pad(x2d, ((0, n_pad), (0, 0)))
    rows = (N + n_pad) // group
    x2d = x2d.reshape(rows, group * hp)     # free reshape when no padding added

    w1p, b1p, w2p, b2p = prepare_ffn_params(w1, b1, w2, b2, hp, group, inputs.dtype)

    out2d = _ffn_pallas(x2d, w1p, b1p, w2p, b2p)
    out = out2d.reshape(rows * group, hp)[:N, :H]
    return out.reshape(B, L, H)


def _reference(inputs, w1, b1, w2, b2):
    # Pure-JAX reference mirroring the PyTorch forward (dropout = identity).
    h = jnp.maximum(jnp.einsum("blh,oh->blo", inputs, w1) + b1, 0.0)
    y = jnp.einsum("blh,oh->blo", h, w2) + b2
    return y + inputs


if __name__ == "__main__":
    key = jax.random.PRNGKey(0)

    def _make_case(H, B=2, L=8):
        k = jax.random.split(jax.random.fold_in(key, H), 5)
        inputs = jax.random.normal(k[0], (B, L, H), dtype=jnp.float32)
        w1 = jax.random.normal(k[1], (H, H), dtype=jnp.float32) * 0.1
        b1 = jax.random.normal(k[2], (H,), dtype=jnp.float32) * 0.1
        w2 = jax.random.normal(k[3], (H, H), dtype=jnp.float32) * 0.1
        b2 = jax.random.normal(k[4], (H,), dtype=jnp.float32) * 0.1
        return inputs, w1, b1, w2, b2

    # Case 1: hidden_units=32 (power-of-two, pack 4 tokens per 128-lane row).
    args = _make_case(32)
    out = jax.block_until_ready(pointwise_feedforward(*args))
    ref = _reference(*args)
    assert out.shape == args[0].shape
    assert jnp.allclose(out, ref, atol=1e-5, rtol=1e-5), "mismatch vs reference (H=32)"

    # Case 2: hidden_units=50 (SASRec default; exercises the zero-pad packing path).
    args = _make_case(50)
    out = jax.block_until_ready(pointwise_feedforward(*args))
    ref = _reference(*args)
    assert out.shape == args[0].shape
    assert jnp.allclose(out, ref, atol=1e-5, rtol=1e-5), "mismatch vs reference (H=50)"

    print("KERNEL_OK")
</pallas_src>

<mosaic_0001>
module attributes {stable_mosaic.version = 11 : i64} {
  func.func @_ffn_kernel(%arg0: i32, %arg1: memref<4x128xf32, #tpu.memory_space<vmem>>, %arg2: memref<128x128xf32, #tpu.memory_space<vmem>>, %arg3: memref<1x128xf32, #tpu.memory_space<vmem>>, %arg4: memref<128x128xf32, #tpu.memory_space<vmem>>, %arg5: memref<1x128xf32, #tpu.memory_space<vmem>>, %arg6: memref<4x128xf32, #tpu.memory_space<vmem>>) attributes {dimension_semantics = [#tpu.dimension_semantics<parallel>], iteration_bounds = array<i64: 1>, scalar_prefetch = 0 : i64, scratch_operands = 0 : i64, tpu.core_type = #tpu.core_type<tc>, window_params = [{transform_indices = @transform_0, window_bounds = array<i64: 4, 128>}, {pipeline_mode = #tpu.pipeline_mode<synchronous>, transform_indices = @transform_1, window_bounds = array<i64: 128, 128>}, {pipeline_mode = #tpu.pipeline_mode<synchronous>, transform_indices = @transform_2, window_bounds = array<i64: 1, 128>}, {pipeline_mode = #tpu.pipeline_mode<synchronous>, transform_indices = @transform_3, window_bounds = array<i64: 128, 128>}, {pipeline_mode = #tpu.pipeline_mode<synchronous>, transform_indices = @transform_4, window_bounds = array<i64: 1, 128>}, {transform_indices = @transform_5, window_bounds = array<i64: 4, 128>}]} {
    %c0 = arith.constant 0 : index
    %c0_0 = arith.constant 0 : index
    %0 = vector.load %arg1[%c0, %c0_0] : memref<4x128xf32, #tpu.memory_space<vmem>>, vector<4x128xf32>
    %c0_1 = arith.constant 0 : index
    %c0_2 = arith.constant 0 : index
    %1 = vector.load %arg2[%c0_1, %c0_2] : memref<128x128xf32, #tpu.memory_space<vmem>>, vector<128x128xf32>
    %cst = arith.constant dense<0.000000e+00> : vector<4x128xf32>
    %2 = tpu.matmul %0, %1, %cst {dimension_numbers = #tpu.dot_dimension_numbers<[1], [0], [0], [1], [0, 0, 1, 1], [], []>} : vector<4x128xf32>, vector<128x128xf32>, vector<4x128xf32> -> vector<4x128xf32>
    %c0_3 = arith.constant 0 : index
    %c0_4 = arith.constant 0 : index
    %3 = vector.load %arg3[%c0_3, %c0_4] : memref<1x128xf32, #tpu.memory_space<vmem>>, vector<1x128xf32>
    %4 = vector.broadcast %3 : vector<1x128xf32> to vector<4x128xf32>
    %5 = arith.addf %2, %4 : vector<4x128xf32>
    %cst_5 = arith.constant 0.000000e+00 : f32
    %6 = vector.broadcast %cst_5 : f32 to vector<4x128xf32>
    %7 = arith.maximumf %5, %6 : vector<4x128xf32>
    %c0_6 = arith.constant 0 : index
    %c0_7 = arith.constant 0 : index
    %8 = vector.load %arg4[%c0_6, %c0_7] : memref<128x128xf32, #tpu.memory_space<vmem>>, vector<128x128xf32>
    %cst_8 = arith.constant dense<0.000000e+00> : vector<4x128xf32>
    %9 = tpu.matmul %7, %8, %cst_8 {dimension_numbers = #tpu.dot_dimension_numbers<[1], [0], [0], [1], [0, 0, 1, 1], [], []>} : vector<4x128xf32>, vector<128x128xf32>, vector<4x128xf32> -> vector<4x128xf32>
    %c0_9 = arith.constant 0 : index
    %c0_10 = arith.constant 0 : index
    %10 = vector.load %arg5[%c0_9, %c0_10] : memref<1x128xf32, #tpu.memory_space<vmem>>, vector<1x128xf32>
    %11 = vector.broadcast %10 : vector<1x128xf32> to vector<4x128xf32>
    %12 = arith.addf %9, %11 : vector<4x128xf32>
    %13 = arith.addf %12, %0 : vector<4x128xf32>
    %c0_11 = arith.constant 0 : index
    %c0_12 = arith.constant 0 : index
    %14 = vector.load %arg6[%c0_11, %c0_12] : memref<4x128xf32, #tpu.memory_space<vmem>>, vector<4x128xf32>
    tpu.vector_store %arg6[%c0_11, %c0_12], %13 {strides = array<i32>} : memref<4x128xf32, #tpu.memory_space<vmem>>, vector<4x128xf32>,
    return
  }
  func.func @transform_0(%arg0: i32) -> (i32, i32) {
    %c0_i32 = arith.constant 0 : i32
    %c0_i32_0 = arith.constant 0 : i32
    return %arg0, %c0_i32 : i32, i32
  }
  func.func @transform_1(%arg0: i32) -> (i32, i32) {
    %c0_i32 = arith.constant 0 : i32
    %c0_i32_0 = arith.constant 0 : i32
    %c0_i32_1 = arith.constant 0 : i32
    return %c0_i32, %c0_i32_0 : i32, i32
  }
  func.func @transform_2(%arg0: i32) -> (i32, i32) {
    %c0_i32 = arith.constant 0 : i32
    %c0_i32_0 = arith.constant 0 : i32
    %c0_i32_1 = arith.constant 0 : i32
    return %c0_i32, %c0_i32_0 : i32, i32
  }
  func.func @transform_3(%arg0: i32) -> (i32, i32) {
    %c0_i32 = arith.constant 0 : i32
    %c0_i32_0 = arith.constant 0 : i32
    %c0_i32_1 = arith.constant 0 : i32
    return %c0_i32, %c0_i32_0 : i32, i32
  }
  func.func @transform_4(%arg0: i32) -> (i32, i32) {
    %c0_i32 = arith.constant 0 : i32
    %c0_i32_0 = arith.constant 0 : i32
    %c0_i32_1 = arith.constant 0 : i32
    return %c0_i32, %c0_i32_0 : i32, i32
  }
  func.func @transform_5(%arg0: i32) -> (i32, i32) {
    %c0_i32 = arith.constant 0 : i32
    %c0_i32_0 = arith.constant 0 : i32
    return %arg0, %c0_i32 : i32, i32
  }
}

</mosaic_0001>

<llo_original>
// kernel: tile.13
$region0: #{tile.13}
  #allocation0 [shape = 's32[1]{0}', space=sflag, size = 0x4, scoped, tag = 'scoped memory for tile.13']
  %s0 = inlined_call_operand.vmem [shape: f32[32], index: 0, kind: input, shape index: {}]
  %s1 = inlined_call_operand.vmem [shape: f32[4,32], index: 1, kind: output, shape index: {}]
  // Predicated region
  $region2: #{tile.13} parent=0 // pred_check
    _
  $region3: #{tile.13} parent=0 // pred_check_branch
    %3 = sbr.rel (0) target = $region5
  $region4: #{tile.13} parent=0 // pred_region
    _
  $region5: #{tile.13} parent=0 // pred_fallthru
    _
  %v4 = vld [vmem:[%s0] ss:$0 sm:$0xff]
  %5 = vst [vmem:[%s1] sm:$0xf] %v4

// kernel: tile.18
$region0: #{tile.18}
  %s0 = inlined_call_operand.vmem [shape: f32[4,32], index: 0, kind: input, shape index: {}]
  %s1 = inlined_call_operand.vmem [shape: f32[1,128], index: 1, kind: output, shape index: {}]
  $region1: #{tile.18} parent=0
    #allocation0 [shape = 'u8[4096]{0}', space=vmem, size = 0x1000, scoped, tag = 'scoped mem for output reshape']
    #allocation1 [shape = 'u8[4096]{0}', space=vmem, size = 0x1000, scoped, tag = 'scoped mem for input reshape']
    %s3 = sshllo.u32 0, 4
    %v4 = vld [vmem:[%s0] sm:%s3]
    %5 = vst [vmem:[#allocation1] sm:%s3] %v4
    %v6 = vld [vmem:[#allocation1] sm:$0x1]
    %vm7 = vcmask 261120
    %8 = vst.msk [vmem:[#allocation0] sm:$0x1] %vm7, %v6
    %s9 = scalar_lea.vmem [#allocation1], 3
    %v10 = vld [vmem:[%s9] sm:$0x1]
    %11 = vrot.lane.b32.xlu0 %v10, 96
    %v12 = vpop.permute.xlu0 %11
    %vm13 = vcmask 1048320
    %14 = vst.msk [vmem:[#allocation0] sm:$0x1] %vm13, %v12
    %s15 = scalar_lea.vmem [#allocation1], 2
    %v16 = vld [vmem:[%s15] sm:$0x1]
    %17 = vrot.lane.b32.xlu0 %v16, 64
    %v18 = vpop.permute.xlu0 %17
    %vm19 = vcmask 785920
    %20 = vst.msk [vmem:[#allocation0] sm:$0x1] %vm19, %v18
    %s21 = scalar_lea.vmem [#allocation1], 1
    %v22 = vld [vmem:[%s21] sm:$0x1]
    %23 = vrot.lane.b32.xlu0 %v22, 32
    %v24 = vpop.permute.xlu0 %23
    %vm25 = vcmask 523520
    %26 = vst.msk [vmem:[#allocation0] sm:$0x1] %vm25, %v24
    %s28 = sshllo.u32 0, 1
    %v30 = vld [vmem:[#allocation0] sm:%s28]
    %s31 = sshllo.u32 0, 1
    %32 = vst [vmem:[%s1] sm:%s31] %v30

// kernel: pointwise_feedforward.1
$region0: #{pointwise_feedforward.1}
  #allocation0 [shape = 'u32[]', space=smem, size = 0x4, offset = 0x4, fixed_abs, tag = 'smem constant byte address 0x4 - core index']
  #allocation1 [shape = 'u32[144,128]{1,0:T(1,128)}', space=vmem, size = 0x12000, scoped, tag = 'internal scratch']
  %s0 = inlined_call_operand.vmem [shape: f32[4,128], index: 0, kind: input, shape index: {}]
  %s1 = inlined_call_operand.vmem [shape: f32[128,128], index: 1, kind: input, shape index: {}]
  %s2 = inlined_call_operand.vmem [shape: f32[1,128], index: 2, kind: input, shape index: {}]
  %s3 = inlined_call_operand.vmem [shape: f32[128,128], index: 3, kind: input, shape index: {}]
  %s4 = inlined_call_operand.vmem [shape: f32[1,128], index: 4, kind: input, shape index: {}]
  %s5 = inlined_call_operand.vmem [shape: f32[4,128], index: 5, kind: output, shape index: {}]
  %s6 = sld [smem:[#allocation0]]
  $region30: #{pointwise_feedforward.1} parent=0
    _
  %s8 = ssub.s32 1, %s6
  %s9 = scalar_select 0, %s8, %s6
  // Predicated region
  $region2: #{pointwise_feedforward.1} parent=0 // pred_check
    _
  $region3: #{pointwise_feedforward.1} parent=0 // pred_check_branch
    %11 = sbr.rel (0) target = $region5
  $region4: #{pointwise_feedforward.1} parent=0 // pred_region
    _
  $region5: #{pointwise_feedforward.1} parent=0 // pred_fallthru
    _
  // Predicated region
  $region6: #{pointwise_feedforward.1} parent=0 // pred_check
    _
  $region7: #{pointwise_feedforward.1} parent=0 // pred_check_branch
    %13 = sbr.rel (0) target = $region9
  $region8: #{pointwise_feedforward.1} parent=0 // pred_region
    _
  $region9: #{pointwise_feedforward.1} parent=0 // pred_fallthru
    _
  // Predicated region
  $region10: #{pointwise_feedforward.1} parent=0 // pred_check
    _
  $region11: #{pointwise_feedforward.1} parent=0 // pred_check_branch
    %15 = sbr.rel (0) target = $region13
  $region12: #{pointwise_feedforward.1} parent=0 // pred_region
    _
  $region13: #{pointwise_feedforward.1} parent=0 // pred_fallthru
    _
  // Predicated region
  $region14: #{pointwise_feedforward.1} parent=0 // pred_check
    _
  $region15: #{pointwise_feedforward.1} parent=0 // pred_check_branch
    %17 = sbr.rel (0) target = $region17
  $region16: #{pointwise_feedforward.1} parent=0 // pred_region
    _
  $region17: #{pointwise_feedforward.1} parent=0 // pred_fallthru
    _
  // Predicated region
  $region18: #{pointwise_feedforward.1} parent=0 // pred_check
    _
  $region19: #{pointwise_feedforward.1} parent=0 // pred_check_branch
    %19 = sbr.rel (0) target = $region21
  $region20: #{pointwise_feedforward.1} parent=0 // pred_region
    _
  $region21: #{pointwise_feedforward.1} parent=0 // pred_fallthru
    _
  %v20 = vld [vmem:[%s0] sm:$0xf]
  %v21 = vld [vmem:[%s1] sm:$0xff]
  %v22 = vld [vmem:[%s1 + $0x8] sm:$0xff]
  %v23 = vld [vmem:[%s1 + $0x10] sm:$0xff]
  %v24 = vld [vmem:[%s1 + $0x18] sm:$0xff]
  %v25 = vld [vmem:[%s1 + $0x20] sm:$0xff]
  %v26 = vld [vmem:[%s1 + $0x28] sm:$0xff]
  %v27 = vld [vmem:[%s1 + $0x30] sm:$0xff]
  %v28 = vld [vmem:[%s1 + $0x38] sm:$0xff]
  %v29 = vld [vmem:[%s1 + $0x40] sm:$0xff]
  %v30 = vld [vmem:[%s1 + $0x48] sm:$0xff]
  %v31 = vld [vmem:[%s1 + $0x50] sm:$0xff]
  %v32 = vld [vmem:[%s1 + $0x58] sm:$0xff]
  %v33 = vld [vmem:[%s1 + $0x60] sm:$0xff]
  %v34 = vld [vmem:[%s1 + $0x68] sm:$0xff]
  %v35 = vld [vmem:[%s1 + $0x70] sm:$0xff]
  %v36 = vld [vmem:[%s1 + $0x78] sm:$0xff]
  %v37 = vld [vmem:[%s2] sm:$0x1]
  %v39 = vlaneseq
  %v40 = vshrl.u32 %v39, 7
  %v41 = vsub.s32 0, %v40
  %v42 = vrot.slane %v37, %v41
  %44 = vmatprep.subr.mxu0 0.0
  %45 = vmatpush1.msra.mxu0 %v21
  %46 = vmatprep.subr.mxu0 0.0
  %47 = vmatpush1.msra.mxu0 %v22
  %48 = vmatprep.subr.mxu0 0.0
  %49 = vmatpush1.msra.mxu0 %v23
  %50 = vmatprep.subr.mxu0 0.0
  %51 = vmatpush1.msra.mxu0 %v24
  %52 = vmatprep.subr.mxu0 0.0
  %53 = vmatpush1.msra.mxu0 %v25
  %54 = vmatprep.subr.mxu0 0.0
  %55 = vmatpush1.msra.mxu0 %v26
  %56 = vmatprep.subr.mxu0 0.0
  %57 = vmatpush1.msra.mxu0 %v27
  %58 = vmatprep.subr.mxu0 0.0
  %59 = vmatpush1.msra.mxu0 %v28
  %60 = vmatprep.subr.mxu0 0.0
  %61 = vmatpush1.msra.mxu0 %v29
  %62 = vmatprep.subr.mxu0 0.0
  %63 = vmatpush1.msra.mxu0 %v30
  %64 = vmatprep.subr.mxu0 0.0
  %65 = vmatpush1.msra.mxu0 %v31
  %66 = vmatprep.subr.mxu0 0.0
  %67 = vmatpush1.msra.mxu0 %v32
  %68 = vmatprep.subr.mxu0 0.0
  %69 = vmatpush1.msra.mxu0 %v33
  %70 = vmatprep.subr.mxu0 0.0
  %71 = vmatpush1.msra.mxu0 %v34
  %72 = vmatprep.subr.mxu0 0.0
  %73 = vmatpush1.msra.mxu0 %v35
  %74 = vmatprep.subr.mxu0 0.0
  %75 = vmatpush1.msra.mxu0 %v36
  %76 = vmatprep.subr.mxu0 0.0
  %77 = vmatpush1.msra.mxu0 0.0
  %78 = vmatprep.subr.mxu0 0.0
  %79 = vmatpush1.msra.mxu0 0.0
  %80 = vmatprep.subr.mxu0 0.0
  %81 = vmatpush1.msra.mxu0 0.0
  %82 = vmatprep.subr.mxu0 0.0
  %83 = vmatpush1.msra.mxu0 0.0
  %84 = vmatprep.subr.mxu0 0.0
  %85 = vmatpush1.msra.mxu0 0.0
  %86 = vmatprep.subr.mxu0 0.0
  %87 = vmatpush1.msra.mxu0 0.0
  %88 = vmatprep.subr.mxu0 0.0
  %89 = vmatpush1.msra.mxu0 0.0
  %90 = vmatprep.subr.mxu0 0.0
  %91 = vmatpush1.msra.mxu0 0.0
  %92 = vmatprep.subr.mxu0 0.0
  %93 = vmatpush1.msra.mxu0 0.0
  %94 = vmatprep.subr.mxu0 0.0
  %95 = vmatpush1.msra.mxu0 0.0
  %96 = vmatprep.subr.mxu0 0.0
  %97 = vmatpush1.msra.mxu0 0.0
  %98 = vmatprep.subr.mxu0 0.0
  %99 = vmatpush1.msra.mxu0 0.0
  %100 = vmatprep.subr.mxu0 0.0
  %101 = vmatpush1.msra.mxu0 0.0
  %102 = vmatprep.subr.mxu0 0.0
  %103 = vmatpush1.msra.mxu0 0.0
  %104 = vmatprep.subr.mxu0 0.0
  %105 = vmatpush1.msra.mxu0 0.0
  %106 = vmatprep.subr.mxu0 0.0
  %107 = vmatpush1.msra.mxu0 0.0
  %108 = vmatprep.mubr.f32.mxu0 0.0
  %109 = vmatmul.mubr.f32.gmra.mrb[0].mxu0 %v20
  %v110 = vpop.f32.mrb[0].mxu0
  %v111 = vadd.f32 %v42, %v110
  %v112 = vpop.f32.mrb[0].mxu0
  %113 = vdwg.mxu0
  %v114 = vmax.f32 %v111, 0.0
  %v115 = vld [vmem:[%s3] sm:$0xff]
  %v116 = vld [vmem:[%s3 + $0x8] sm:$0xff]
  %v117 = vld [vmem:[%s3 + $0x10] sm:$0xff]
  %v118 = vld [vmem:[%s3 + $0x18] sm:$0xff]
  %v119 = vld [vmem:[%s3 + $0x20] sm:$0xff]
  %v120 = vld [vmem:[%s3 + $0x28] sm:$0xff]
  %v121 = vld [vmem:[%s3 + $0x30] sm:$0xff]
  %v122 = vld [vmem:[%s3 + $0x38] sm:$0xff]
  %v123 = vld [vmem:[%s3 + $0x40] sm:$0xff]
  %v124 = vld [vmem:[%s3 + $0x48] sm:$0xff]
  %v125 = vld [vmem:[%s3 + $0x50] sm:$0xff]
  %v126 = vld [vmem:[%s3 + $0x58] sm:$0xff]
  %v127 = vld [vmem:[%s3 + $0x60] sm:$0xff]
  %v128 = vld [vmem:[%s3 + $0x68] sm:$0xff]
  %v129 = vld [vmem:[%s3 + $0x70] sm:$0xff]
  %v130 = vld [vmem:[%s3 + $0x78] sm:$0xff]
  %v131 = vld [vmem:[%s4] sm:$0x1]
  %v133 = vlaneseq
  %v134 = vshrl.u32 %v133, 7
  %v135 = vsub.s32 0, %v134
  %v136 = vrot.slane %v131, %v135
  %138 = vmatprep.subr.mxu0 0.0
  %139 = vmatpush1.msra.mxu0 %v115
  %140 = vmatprep.subr.mxu0 0.0
  %141 = vmatpush1.msra.mxu0 %v116
  %142 = vmatprep.subr.mxu0 0.0
  %143 = vmatpush1.msra.mxu0 %v117
  %144 = vmatprep.subr.mxu0 0.0
  %145 = vmatpush1.msra.mxu0 %v118
  %146 = vmatprep.subr.mxu0 0.0
  %147 = vmatpush1.msra.mxu0 %v119
  %148 = vmatprep.subr.mxu0 0.0
  %149 = vmatpush1.msra.mxu0 %v120
  %150 = vmatprep.subr.mxu0 0.0
  %151 = vmatpush1.msra.mxu0 %v121
  %152 = vmatprep.subr.mxu0 0.0
  %153 = vmatpush1.msra.mxu0 %v122
  %154 = vmatprep.subr.mxu0 0.0
  %155 = vmatpush1.msra.mxu0 %v123
  %156 = vmatprep.subr.mxu0 0.0
  %157 = vmatpush1.msra.mxu0 %v124
  %158 = vmatprep.subr.mxu0 0.0
  %159 = vmatpush1.msra.mxu0 %v125
  %160 = vmatprep.subr.mxu0 0.0
  %161 = vmatpush1.msra.mxu0 %v126
  %162 = vmatprep.subr.mxu0 0.0
  %163 = vmatpush1.msra.mxu0 %v127
  %164 = vmatprep.subr.mxu0 0.0
  %165 = vmatpush1.msra.mxu0 %v128
  %166 = vmatprep.subr.mxu0 0.0
  %167 = vmatpush1.msra.mxu0 %v129
  %168 = vmatprep.subr.mxu0 0.0
  %169 = vmatpush1.msra.mxu0 %v130
  %170 = vmatprep.subr.mxu0 0.0
  %171 = vmatpush1.msra.mxu0 0.0
  %172 = vmatprep.subr.mxu0 0.0
  %173 = vmatpush1.msra.mxu0 0.0
  %174 = vmatprep.subr.mxu0 0.0
  %175 = vmatpush1.msra.mxu0 0.0
  %176 = vmatprep.subr.mxu0 0.0
  %177 = vmatpush1.msra.mxu0 0.0
  %178 = vmatprep.subr.mxu0 0.0
  %179 = vmatpush1.msra.mxu0 0.0
  %180 = vmatprep.subr.mxu0 0.0
  %181 = vmatpush1.msra.mxu0 0.0
  %182 = vmatprep.subr.mxu0 0.0
  %183 = vmatpush1.msra.mxu0 0.0
  %184 = vmatprep.subr.mxu0 0.0
  %185 = vmatpush1.msra.mxu0 0.0
  %186 = vmatprep.subr.mxu0 0.0
  %187 = vmatpush1.msra.mxu0 0.0
  %188 = vmatprep.subr.mxu0 0.0
  %189 = vmatpush1.msra.mxu0 0.0
  %190 = vmatprep.subr.mxu0 0.0
  %191 = vmatpush1.msra.mxu0 0.0
  %192 = vmatprep.subr.mxu0 0.0
  %193 = vmatpush1.msra.mxu0 0.0
  %194 = vmatprep.subr.mxu0 0.0
  %195 = vmatpush1.msra.mxu0 0.0
  %196 = vmatprep.subr.mxu0 0.0
  %197 = vmatpush1.msra.mxu0 0.0
  %198 = vmatprep.subr.mxu0 0.0
  %199 = vmatpush1.msra.mxu0 0.0
  %200 = vmatprep.subr.mxu0 0.0
  %201 = vmatpush1.msra.mxu0 0.0
  %202 = vmatprep.mubr.f32.mxu0 0.0
  %203 = vmatmul.mubr.f32.gmra.mrb[0].mxu0 %v114
  %v204 = vpop.f32.mrb[0].mxu0
  %v205 = vadd.f32 %v136, %v204
  %v206 = vpop.f32.mrb[0].mxu0
  %207 = vdwg.mxu0
  %v208 = vadd.f32 %v205, %v20
  %209 = vst [vmem:[%s5] sm:$0xf] %v208
  // Predicated region
  $region22: #{pointwise_feedforward.1} parent=0 // pred_check
    _
  $region23: #{pointwise_feedforward.1} parent=0 // pred_check_branch
    %211 = sbr.rel (0) target = $region25
  $region24: #{pointwise_feedforward.1} parent=0 // pred_region
    _
  $region25: #{pointwise_feedforward.1} parent=0 // pred_fallthru
    _
  // Predicated region
  $region26: #{pointwise_feedforward.1} parent=0 // pred_check
    _
  $region27: #{pointwise_feedforward.1} parent=0 // pred_check_branch
    %213 = sbr.rel (0) target = $region29
  $region28: #{pointwise_feedforward.1} parent=0 // pred_region
    _
  $region29: #{pointwise_feedforward.1} parent=0 // pred_fallthru
    _

</llo_original>
